<compile_context>
chip_gen: v6e
topology: v6e:2x2x1
jax: 0.10.0
libtpu: 0.0.40
codegen_flags: <defaults>
</compile_context>

<pallas_src>
import jax
import jax.numpy as jnp
from jax.experimental import pallas as pl
from jax.experimental.pallas import tpu as pltpu


# --------------------------------------------------------------------------- #
# Kernel
# --------------------------------------------------------------------------- #
def _freq_kernel(x_ref, fh_ref, fw_ref, out_ref):
    bb, _, h, w = x_ref.shape
    mm_dtype = fh_ref.dtype

    # Grayscale mix (VPU), cast to the MXU operand dtype.
    gray = (0.2989 * x_ref[:, 0, :, :]
            + 0.587 * x_ref[:, 1, :, :]
            + 0.114 * x_ref[:, 2, :, :]).astype(mm_dtype)              # (bb, h, w)

    # ---- Stage 1 (row DFT), transposed orientation, ONE wide matmul:
    #   [Re(A)^T | Im(A)^T] = X^T @ [Re(Fh_s)^T | Im(Fh_s)^T]
    gt = jnp.swapaxes(gray, 1, 2).reshape(bb * w, h)                    # (bb*w, h)
    at = jnp.dot(gt, fh_ref[...], preferred_element_type=jnp.float32)  # (bb*w, 2h)

    # Back to image orientation (batched XLU transposes, no per-image loop),
    # real/imag halves packed side by side so stage 2 is a single matmul.
    ar = jnp.swapaxes(at[:, :h].reshape(bb, w, h), 1, 2).reshape(bb * h, w)
    ai = jnp.swapaxes(at[:, h:].reshape(bb, w, h), 1, 2).reshape(bb * h, w)
    lhs = jnp.concatenate([ar, ai], axis=1).astype(mm_dtype)            # (bb*h, 2w)

    # ---- Stage 2 (col DFT): ONE matmul.  fftshift, complex combine and the
    # torch.rfft (re, im) lane interleave are all folded into fw host-side, so
    # the f32 accumulator directly holds the packed output slab.
    y = jnp.dot(lhs, fw_ref[...], preferred_element_type=jnp.float32)   # (bb*h, 2w)

    # Elementwise |.| on the packed (re, im) values, then 20 * natural log.
    # Exact-zero bins become -inf (matches torch.log of torch.abs == 0).
    out_ref[...] = (20.0 * jnp.log(jnp.abs(y))
                    ).reshape(bb, h, 2 * w).astype(out_ref.dtype)


# --------------------------------------------------------------------------- #
# Host-side constant construction / planning
# --------------------------------------------------------------------------- #
def _dft_matrices(h, w, dtype):
    """Shift-baked, fused DFT matrices for both stages (built once, XLA side)."""
    def _cos_sin(n):
        k = jnp.arange(n, dtype=jnp.int32)
        kk = (k[:, None] * k[None, :]) % n            # exact integer phase index
        theta = (-2.0 * jnp.pi / n) * kk.astype(jnp.float32)
        return jnp.cos(theta), jnp.sin(theta)         # Re/Im of exp(-2*pi*i*jk/n)

    # Stage 1: (row-rolled F_H)^T == column-rolled F_H (F symmetric),
    # real|imag halves fused along columns -> (h, 2h).
    fhr, fhi = _cos_sin(h)
    fh = jnp.concatenate([jnp.roll(fhr, h // 2, axis=1),
                          jnp.roll(fhi, h // 2, axis=1)], axis=1)

    # Stage 2: column-rolled F_W with (re, im) columns interleaved, stacked
    # over the real/imag LHS halves -> (2w, 2w):
    #   y[:, 2j]   = Re(A)@Re - Im(A)@Im = Re(Y_s)[:, j]
    #   y[:, 2j+1] = Re(A)@Im + Im(A)@Re = Im(Y_s)[:, j]
    fwr, fwi = _cos_sin(w)
    fwr_s = jnp.roll(fwr, w // 2, axis=1)
    fwi_s = jnp.roll(fwi, w // 2, axis=1)
    gwr = jnp.stack([fwr_s, fwi_s], axis=-1).reshape(w, 2 * w)
    gwi = jnp.stack([-fwi_s, fwr_s], axis=-1).reshape(w, 2 * w)
    fw = jnp.concatenate([gwr, gwi], axis=0)

    return fh.astype(dtype), fw.astype(dtype)


def _vmem_budget_bytes():
    """Usable scoped-VMEM budget for this TPU generation (~25% headroom left
    for compiler-internal scratch).  Falls back to a v7x-sized 64 MiB part."""
    try:
        cap = int(pltpu.get_tpu_info().vmem_capacity_bytes)
    except Exception:
        cap = 64 * 1024 * 1024
    return (3 * cap) // 4


def _plan(n, h, w, mm_bytes, budget):
    """Pick batch block `bb`, input pipeline depth and vmem limit from the full
    per-step footprint (in/out blocks, intermediates, single-buffered DFTs)."""
    const_bytes = (2 * h * h + 4 * w * w) * mm_bytes        # fh + fw, 1 buffer

    def footprint(bb, in_bufs):
        in_blk = bb * 3 * h * w * 4                          # f32 input block
        out_blk = bb * h * 2 * w * 4                         # f32 output block
        inter = 12 * bb * h * w * 4                          # gray/gt/at/ar/ai/lhs/y
        return in_bufs * in_blk + 2 * out_blk + inter + const_bytes

    bb = 1
    for cand in range(1, 33):
        if footprint(cand, 2) <= budget:
            bb = cand
    if n >= 2:
        bb = min(bb, -(-n // 2))     # keep >= 2 grid steps (v7x has 2 TCs)
    bb = max(1, min(bb, max(n, 1)))

    in_bufs = 2
    if bb * 3 * h * w * 4 <= 4 * 1024 * 1024 and footprint(bb, 3) <= budget:
        in_bufs = 3                  # short per-step compute: hide input DMA

    vmem_limit = int(min(budget,
                         max(int(footprint(bb, in_bufs) * 1.25),
                             32 * 1024 * 1024)))
    return bb, in_bufs, vmem_limit


def _spec(shape, index_map, buffers=None):
    """BlockSpec with an optional pipeline depth; degrades gracefully if this
    JAX build's BlockSpec has no `pipeline_mode` parameter."""
    if buffers is None or buffers == 2:          # 2 == default double buffering
        return pl.BlockSpec(shape, index_map)
    try:
        return pl.BlockSpec(shape, index_map, pipeline_mode=pl.Buffered(buffers))
    except (TypeError, ValueError, AttributeError):
        return pl.BlockSpec(shape, index_map)


# --------------------------------------------------------------------------- #
# Public wrapper
# --------------------------------------------------------------------------- #
def frequency_extractor(x: jax.Array, *, compute_dtype=jnp.bfloat16) -> jax.Array:
    """x: (N, 3, H, W) -> (N, 1, H, W, 2) float32 magnitude spectrum.

    `compute_dtype` sets the MXU operand dtype (accumulation is always f32).
    bf16 is the fast default on every TPU generation; pass jnp.float32 for
    strict numerical parity (bf16 twiddles carry ~3 significant digits, which
    matters near spectral nulls at large H/W).
    """
    n, c, h, w = x.shape
    assert c == 3, "FrequencyExtractor expects 3 channels (RGB) along dim=-3"
    assert h % 8 == 0 and w % 8 == 0, "H and W must be multiples of 8"
    x = x.astype(jnp.float32)

    mm_bytes = jnp.dtype(compute_dtype).itemsize
    fh, fw = _dft_matrices(h, w, compute_dtype)
    bb, in_bufs, vmem_limit = _plan(n, h, w, mm_bytes, _vmem_budget_bytes())

    # Pad the batch so odd/prime N doesn't collapse to bb == 1 efficiency;
    # padded (all-zero) images are discarded below.
    n_pad = -(-n // bb) * bb
    if n_pad != n:
        x = jnp.pad(x, ((0, n_pad - n), (0, 0), (0, 0), (0, 0)))

    def _run(with_depth_hints: bool):
        depth = (lambda b: b) if with_depth_hints else (lambda b: None)
        return pl.pallas_call(
            _freq_kernel,
            out_shape=jax.ShapeDtypeStruct((n_pad, h, 2 * w), jnp.float32),
            grid_spec=pltpu.PrefetchScalarGridSpec(
                num_scalar_prefetch=0,
                grid=(n_pad // bb,),
                in_specs=[
                    _spec((bb, 3, h, w), lambda i: (i, 0, 0, 0), depth(in_bufs)),
                    # Grid-invariant DFT matrices: single-buffered.
                    _spec((h, 2 * h), lambda i: (0, 0), depth(1)),
                    _spec((2 * w, 2 * w), lambda i: (0, 0), depth(1)),
                ],
                out_specs=pl.BlockSpec((bb, h, 2 * w), lambda i: (i, 0, 0)),
            ),
            compiler_params=pltpu.CompilerParams(
                dimension_semantics=("parallel",),
                vmem_limit_bytes=vmem_limit),
        )(x, fh, fw)

    try:
        out = _run(True)
    except Exception:
        # Fall back to default pipelining if pipeline-depth hints are rejected.
        out = _run(False)

    # (N_pad, H, 2W) -> (N, 1, H, W, 2): re/im already interleaved along the
    # lane axis inside the kernel, so this reshape is a zero-copy bitcast.
    return out[:n].reshape(n, 1, h, w, 2)


# --------------------------------------------------------------------------- #
# Self-test
# --------------------------------------------------------------------------- #
if __name__ == "__main__":
    key = jax.random.PRNGKey(0)
    # Small deterministic input: batch=2, channels=3 (RGB), spatial 16x16.
    x = jax.random.uniform(key, (2, 3, 16, 16), dtype=jnp.float32,
                           minval=0.1, maxval=1.0)

    # Pure-JAX reference, compared in the linear (pre-log) domain so exact-zero
    # bins (which correctly become -inf after the log) stay benign.
    gray = 0.2989 * x[:, 0] + 0.587 * x[:, 1] + 0.114 * x[:, 2]
    f = jnp.fft.fft2(gray)
    ref = jnp.fft.fftshift(
        jnp.stack([jnp.abs(f.real), jnp.abs(f.imag)], axis=-1), axes=(1, 2))
    ref = ref[:, None]                                    # (N, 1, H, W, 2)

    # Fast path (bf16 MXU operands, f32 accumulation) — the default.
    out = frequency_extractor(x)
    jax.block_until_ready(out)
    assert out.shape == (2, 1, 16, 16, 2)
    got = jnp.exp(out / 20.0)
    assert jnp.allclose(got, ref, rtol=5e-2, atol=0.5), "bf16 path mismatch"

    # Strict-parity path (f32 MXU operands).
    out32 = frequency_extractor(x, compute_dtype=jnp.float32)
    jax.block_until_ready(out32)
    got32 = jnp.exp(out32 / 20.0)
    assert jnp.allclose(got32, ref, rtol=5e-3, atol=0.1), "f32 path mismatch"

    print("KERNEL_OK")
</pallas_src>

<mosaic_0001>
module attributes {stable_mosaic.version = 11 : i64} {
  func.func @_freq_kernel(%arg0: i32, %arg1: memref<1x3x16x16xf32, #tpu.memory_space<vmem>>, %arg2: memref<16x32xbf16, #tpu.memory_space<vmem>>, %arg3: memref<32x32xbf16, #tpu.memory_space<vmem>>, %arg4: memref<1x16x32xf32, #tpu.memory_space<vmem>>) attributes {dimension_semantics = [#tpu.dimension_semantics<parallel>], iteration_bounds = array<i64: 2>, scalar_prefetch = 0 : i64, scratch_operands = 0 : i64, tpu.core_type = #tpu.core_type<tc>, window_params = [{transform_indices = @transform_0, window_bounds = array<i64: 1, 3, 16, 16>}, {pipeline_mode = #tpu.pipeline_mode<synchronous>, transform_indices = @transform_1, window_bounds = array<i64: 16, 32>}, {pipeline_mode = #tpu.pipeline_mode<synchronous>, transform_indices = @transform_2, window_bounds = array<i64: 32, 32>}, {transform_indices = @transform_3, window_bounds = array<i64: 1, 16, 32>}]} {
    %c0 = arith.constant 0 : index
    %c0_0 = arith.constant 0 : index
    %c0_1 = arith.constant 0 : index
    %c0_2 = arith.constant 0 : index
    %0 = vector.load %arg1[%c0, %c0_0, %c0_1, %c0_2] : memref<1x3x16x16xf32, #tpu.memory_space<vmem>>, vector<1x1x16x16xf32>
    %1 = vector.shape_cast %0 : vector<1x1x16x16xf32> to vector<1x16x16xf32>
    %cst = arith.constant 2.989000e-01 : f32
    %2 = vector.broadcast %cst : f32 to vector<1x16x16xf32>
    %3 = arith.mulf %2, %1 : vector<1x16x16xf32>
    %c0_3 = arith.constant 0 : index
    %c1 = arith.constant 1 : index
    %c0_4 = arith.constant 0 : index
    %c0_5 = arith.constant 0 : index
    %4 = vector.load %arg1[%c0_3, %c1, %c0_4, %c0_5] : memref<1x3x16x16xf32, #tpu.memory_space<vmem>>, vector<1x1x16x16xf32>
    %5 = vector.shape_cast %4 : vector<1x1x16x16xf32> to vector<1x16x16xf32>
    %cst_6 = arith.constant 5.870000e-01 : f32
    %6 = vector.broadcast %cst_6 : f32 to vector<1x16x16xf32>
    %7 = arith.mulf %6, %5 : vector<1x16x16xf32>
    %8 = arith.addf %3, %7 : vector<1x16x16xf32>
    %c0_7 = arith.constant 0 : index
    %c2 = arith.constant 2 : index
    %c0_8 = arith.constant 0 : index
    %c0_9 = arith.constant 0 : index
    %9 = vector.load %arg1[%c0_7, %c2, %c0_8, %c0_9] : memref<1x3x16x16xf32, #tpu.memory_space<vmem>>, vector<1x1x16x16xf32>
    %10 = vector.shape_cast %9 : vector<1x1x16x16xf32> to vector<1x16x16xf32>
    %cst_10 = arith.constant 1.140000e-01 : f32
    %11 = vector.broadcast %cst_10 : f32 to vector<1x16x16xf32>
    %12 = arith.mulf %11, %10 : vector<1x16x16xf32>
    %13 = arith.addf %8, %12 : vector<1x16x16xf32>
    %14 = arith.truncf %13 : vector<1x16x16xf32> to vector<1x16x16xbf16>
    %15 = tpu.transpose %14, [0, 2, 1] : vector<1x16x16xbf16> -> vector<1x16x16xbf16>
    %16 = vector.shape_cast %15 : vector<1x16x16xbf16> to vector<16x16xbf16>
    %c0_11 = arith.constant 0 : index
    %c0_12 = arith.constant 0 : index
    %17 = vector.load %arg2[%c0_11, %c0_12] : memref<16x32xbf16, #tpu.memory_space<vmem>>, vector<16x32xbf16>
    %cst_13 = arith.constant dense<0.000000e+00> : vector<16x32xf32>
    %18 = tpu.matmul %16, %17, %cst_13 {dimension_numbers = #tpu.dot_dimension_numbers<[1], [0], [0], [1], [0, 0, 1, 1], [], []>} : vector<16x16xbf16>, vector<16x32xbf16>, vector<16x32xf32> -> vector<16x32xf32>
    %19 = vector.extract_strided_slice %18 {offsets = [0, 0], sizes = [16, 16], strides = [1, 1]} : vector<16x32xf32> to vector<16x16xf32>
    %20 = vector.shape_cast %19 : vector<16x16xf32> to vector<1x16x16xf32>
    %21 = tpu.transpose %20, [0, 2, 1] : vector<1x16x16xf32> -> vector<1x16x16xf32>
    %22 = vector.shape_cast %21 : vector<1x16x16xf32> to vector<16x16xf32>
    %23 = vector.extract_strided_slice %18 {offsets = [0, 16], sizes = [16, 16], strides = [1, 1]} : vector<16x32xf32> to vector<16x16xf32>
    %24 = vector.shape_cast %23 : vector<16x16xf32> to vector<1x16x16xf32>
    %25 = tpu.transpose %24, [0, 2, 1] : vector<1x16x16xf32> -> vector<1x16x16xf32>
    %26 = vector.shape_cast %25 : vector<1x16x16xf32> to vector<16x16xf32>
    %27 = tpu.concatenate %22, %26 in 1 : vector<16x16xf32>, vector<16x16xf32> -> vector<16x32xf32>
    %28 = arith.truncf %27 : vector<16x32xf32> to vector<16x32xbf16>
    %c0_14 = arith.constant 0 : index
    %c0_15 = arith.constant 0 : index
    %29 = vector.load %arg3[%c0_14, %c0_15] : memref<32x32xbf16, #tpu.memory_space<vmem>>, vector<32x32xbf16>
    %cst_16 = arith.constant dense<0.000000e+00> : vector<16x32xf32>
    %30 = tpu.matmul %28, %29, %cst_16 {dimension_numbers = #tpu.dot_dimension_numbers<[1], [0], [0], [1], [0, 0, 1, 1], [], []>} : vector<16x32xbf16>, vector<32x32xbf16>, vector<16x32xf32> -> vector<16x32xf32>
    %31 = math.absf %30 : vector<16x32xf32>
    %32 = math.log %31 : vector<16x32xf32>
    %cst_17 = arith.constant 2.000000e+01 : f32
    %33 = vector.broadcast %cst_17 : f32 to vector<16x32xf32>
    %34 = arith.mulf %33, %32 : vector<16x32xf32>
    %35 = vector.shape_cast %34 : vector<16x32xf32> to vector<1x16x32xf32>
    %c0_18 = arith.constant 0 : index
    %c0_19 = arith.constant 0 : index
    %c0_20 = arith.constant 0 : index
    %36 = vector.load %arg4[%c0_18, %c0_19, %c0_20] : memref<1x16x32xf32, #tpu.memory_space<vmem>>, vector<1x16x32xf32>
    tpu.vector_store %arg4[%c0_18, %c0_19, %c0_20], %35 {strides = array<i32>} : memref<1x16x32xf32, #tpu.memory_space<vmem>>, vector<1x16x32xf32>,
    return
  }
  func.func @transform_0(%arg0: i32) -> (i32, i32, i32, i32) {
    %c0_i32 = arith.constant 0 : i32
    %c0_i32_0 = arith.constant 0 : i32
    %c0_i32_1 = arith.constant 0 : i32
    %c0_i32_2 = arith.constant 0 : i32
    return %arg0, %c0_i32, %c0_i32_0, %c0_i32_1 : i32, i32, i32, i32
  }
  func.func @transform_1(%arg0: i32) -> (i32, i32) {
    %c0_i32 = arith.constant 0 : i32
    %c0_i32_0 = arith.constant 0 : i32
    %c0_i32_1 = arith.constant 0 : i32
    return %c0_i32, %c0_i32_0 : i32, i32
  }
  func.func @transform_2(%arg0: i32) -> (i32, i32) {
    %c0_i32 = arith.constant 0 : i32
    %c0_i32_0 = arith.constant 0 : i32
    %c0_i32_1 = arith.constant 0 : i32
    return %c0_i32, %c0_i32_0 : i32, i32
  }
  func.func @transform_3(%arg0: i32) -> (i32, i32, i32) {
    %c0_i32 = arith.constant 0 : i32
    %c0_i32_0 = arith.constant 0 : i32
    %c0_i32_1 = arith.constant 0 : i32
    return %arg0, %c0_i32, %c0_i32_0 : i32, i32, i32
  }
}

</mosaic_0001>

<llo_original>
// kernel: tpu_custom_call.1
$region0: #{tpu_custom_call.1}
  #allocation0 [shape = 'u32[]', space=smem, size = 0x4, offset = 0x4, fixed_abs, tag = 'smem constant byte address 0x4 - core index']
  #allocation1 [shape = 'u32[144,128]{1,0:T(1,128)}', space=vmem, size = 0x12000, scoped, tag = 'internal scratch']
  %s0 = inlined_call_operand.hbm [shape: f32[2,3,16,16], index: 0, kind: input, shape index: {}]
  %s1 = inlined_call_operand.hbm [shape: bf16[16,32], index: 1, kind: input, shape index: {}]
  %s2 = inlined_call_operand.hbm [shape: bf16[32,32], index: 2, kind: input, shape index: {}]
  %s3 = inlined_call_operand.hbm [shape: f32[2,16,32], index: 3, kind: output, shape index: {}]
  %s4 = sld [smem:[#allocation0]]
  $region57: #{tpu_custom_call.1} parent=0
    _
  %s6 = ssub.s32 1, %s4
  %s7 = scalar_select 0, %s6, %s4
  $region1: #{tpu_custom_call.1} parent=0
    #allocation2 [shape = 'u8[49152]{0}', space=vmem, size = 0xc000, scoped, tag = 'input window, operand 0']
    #allocation3 [shape = 's32[2]{0}', space=sflag, size = 0x8, scoped, tag = 'scoped memory for tpu_custom_call.1']
    #allocation4 [shape = 's32[2]{0}', space=sflag, size = 0x8, scoped, tag = 'scoped memory for tpu_custom_call.1']
    #allocation5 [shape = 'u8[4096]{0}', space=vmem, size = 0x1000, scoped, tag = 'input window, operand 1, single buffered']
    #allocation6 [shape = 's32[1]{0}', space=sflag, size = 0x4, scoped, tag = 'scoped memory for tpu_custom_call.1']
    #allocation7 [shape = 'u8[8192]{0}', space=vmem, size = 0x2000, scoped, tag = 'input window, operand 2, single buffered']
    #allocation8 [shape = 'u8[16384]{0}', space=vmem, size = 0x4000, scoped, tag = 'output window, operand 0']
    %8 = vsyncpa [#allocation3], 0
    %s9 = scalar_lea.sflag [#allocation3], 1
    %10 = vsyncpa %s9, 0
    %11 = vsyncpa [#allocation6], 0
    %12 = vsyncpa [#allocation4], 0
    %s13 = scalar_lea.sflag [#allocation4], 1
    %14 = vsyncpa %s13, 0
    loop: start=0, step=1, limit=4
    $region2: #{tpu_custom_call.1} parent=1 // loop_pre_header
      _
    $region3: #{tpu_custom_call.1} parent=1 // loop_header
      %s16 = sphi 0, %s20
      %p17 = scmp.ge.s32.totalorder %s16, 4
      %s26 = sphi 0, %s28
      %s29 = sphi 0, %s26
      %s30 = sphi 0, %s29
      %s46 = sphi 0, %s30
      %s50 = sphi 0, %s50
      %s52 = sphi 0, %s50
      %s53 = sphi 0, %s52
      %s67 = sphi 0, %s53
      %s71 = sphi 0, %s71
      %s73 = sphi 0, %s71
      %s74 = sphi 0, %s73
      %s88 = sphi 0, %s74
      %s94 = sphi 0, %s96
      %s97 = sphi 0, %s94
      %s98 = sphi 0, %s97
      %s114 = sphi 0, %s98
    $region4: #{tpu_custom_call.1} parent=1 // loop_header_branch
      %19 = sbr.rel (%p17) target = $region8
    $region5: #{tpu_custom_call.1} parent=1 // loop_body
      %s21 = ssub.s32 %s16, 1
      %s22 = ssub.s32 %s16, 2
      %s23 = sadd.s32 %s16, 1
      %s24 = ssub.s32 %s16, %s23
      %p25 = scmp.eq.s32.totalorder %s24, 0
      %s27 = sadd.s32 %s26, 1
      %s28 = scalar_select %p25, %s26, %s27
      %p31 = pneg %p25
      %p32 = scmp.eq.s32.totalorder %s16, 1
      %p33 = por %p31, %p32
      %p34 = scmp.ne.s32.totalorder %s26, %s29
      %p35 = scmp.eq.s32.totalorder %s16, 0
      %p36 = por %p34, %p35
      %p37 = scmp.ne.s32.totalorder %s26, %s29
      %p38 = scmp.eq.s32.totalorder %s21, 1
      %p39 = por %p37, %p38
      %p40 = scmp.ne.s32.totalorder %s29, %s30
      %p41 = scmp.eq.s32.totalorder %s21, 0
      %p42 = por %p40, %p41
      %p43 = scmp.ne.s32.totalorder %s29, %s30
      %p44 = scmp.eq.s32.totalorder %s22, 1
      %p45 = por %p43, %p44
      %p47 = scmp.ne.s32.totalorder %s30, %s46
      %p48 = scmp.eq.s32.totalorder %s22, 0
      %p49 = por %p47, %p48
      %s51 = sadd.s32 %s50, 1
      %p54 = scmp.eq.s32.totalorder %s16, 1
      %p55 = scmp.ne.s32.totalorder %s50, %s52
      %p56 = scmp.eq.s32.totalorder %s16, 0
      %p57 = por %p55, %p56
      %p58 = scmp.ne.s32.totalorder %s50, %s52
      %p59 = scmp.eq.s32.totalorder %s21, 1
      %p60 = por %p58, %p59
      %p61 = scmp.ne.s32.totalorder %s52, %s53
      %p62 = scmp.eq.s32.totalorder %s21, 0
      %p63 = por %p61, %p62
      %p64 = scmp.ne.s32.totalorder %s52, %s53
      %p65 = scmp.eq.s32.totalorder %s22, 1
      %p66 = por %p64, %p65
      %p68 = scmp.ne.s32.totalorder %s53, %s67
      %p69 = scmp.eq.s32.totalorder %s22, 0
      %p70 = por %p68, %p69
      %s72 = sadd.s32 %s71, 1
      %p75 = scmp.eq.s32.totalorder %s16, 1
      %p76 = scmp.ne.s32.totalorder %s71, %s73
      %p77 = scmp.eq.s32.totalorder %s16, 0
      %p78 = por %p76, %p77
      %p79 = scmp.ne.s32.totalorder %s71, %s73
      %p80 = scmp.eq.s32.totalorder %s21, 1
      %p81 = por %p79, %p80
      %p82 = scmp.ne.s32.totalorder %s73, %s74
      %p83 = scmp.eq.s32.totalorder %s21, 0
      %p84 = por %p82, %p83
      %p85 = scmp.ne.s32.totalorder %s73, %s74
      %p86 = scmp.eq.s32.totalorder %s22, 1
      %p87 = por %p85, %p86
      %p89 = scmp.ne.s32.totalorder %s74, %s88
      %p90 = scmp.eq.s32.totalorder %s22, 0
      %p91 = por %p89, %p90
      %s92 = ssub.s32 %s16, %s23
      %p93 = scmp.eq.s32.totalorder %s92, 0
      %s95 = sadd.s32 %s94, 1
      %s96 = scalar_select %p93, %s94, %s95
      %p99 = pneg %p93
      %p100 = scmp.eq.s32.totalorder %s16, 1
      %p101 = por %p99, %p100
      %p102 = scmp.ne.s32.totalorder %s94, %s97
      %p103 = scmp.eq.s32.totalorder %s16, 0
      %p104 = por %p102, %p103
      %p105 = scmp.ne.s32.totalorder %s94, %s97
      %p106 = scmp.eq.s32.totalorder %s21, 1
      %p107 = por %p105, %p106
      %p108 = scmp.ne.s32.totalorder %s97, %s98
      %p109 = scmp.eq.s32.totalorder %s21, 0
      %p110 = por %p108, %p109
      %p111 = scmp.ne.s32.totalorder %s97, %s98
      %p112 = scmp.eq.s32.totalorder %s22, 1
      %p113 = por %p111, %p112
      %p115 = scmp.ne.s32.totalorder %s98, %s114
      %p116 = scmp.eq.s32.totalorder %s22, 0
      %p117 = por %p115, %p116
      %p118 = scmp.le.s32.totalorder 1, %s16
      %p119 = scmp.lt.s32.totalorder %s16, 3
      %p120 = pnand %p118, %p119
      %p121 = pneg %p120
      // Predicated region
      $region9: #{tpu_custom_call.1} parent=5 // pred_check
        _
      $region10: #{tpu_custom_call.1} parent=5 // pred_check_branch
        %123 = sbr.rel (%p120) target = $region12
      $region11: #{tpu_custom_call.1} parent=5 // pred_region
        %s124 = ssub.s32 %s16, 1
        // Predicated region
        $region13: #{tpu_custom_call.1} parent=11 // pred_check
          %p125 = pneg %p63
        $region14: #{tpu_custom_call.1} parent=11 // pred_check_branch
          %127 = sbr.rel (%p125) target = $region16
        $region15: #{tpu_custom_call.1} parent=11 // pred_region
          %s129 = ssub.s32 128, 128
          %130 = vsyncadd [#allocation6], %s129
          %s131 = sshll.u32 [#allocation5], 4
          %s132 = int_to_ptr.vmem [resolvable:$true] %s131
          %137 = dma.hbm_to_vmem [thread:$0]  %s1, 128, %s132, [#allocation6], 64, 64, 4
        $region16: #{tpu_custom_call.1} parent=11 // pred_fallthru
          _
        // Predicated region
        $region17: #{tpu_custom_call.1} parent=11 // pred_check
          %p138 = pneg %p84
        $region18: #{tpu_custom_call.1} parent=11 // pred_check_branch
          %140 = sbr.rel (%p138) target = $region20
        $region19: #{tpu_custom_call.1} parent=11 // pred_region
          %s142 = ssub.s32 256, 256
          %143 = vsyncadd [#allocation6], %s142
          %s144 = sshll.u32 [#allocation7], 4
          %s145 = int_to_ptr.vmem [resolvable:$true] %s144
          %150 = dma.hbm_to_vmem [thread:$0]  %s2, 256, %s145, [#allocation6], 64, 64, 4
        $region20: #{tpu_custom_call.1} parent=11 // pred_fallthru
          _
      $region12: #{tpu_custom_call.1} parent=5 // pred_fallthru
        _
      %p151 = scmp.lt.s32.totalorder %s16, 2
      // Predicated region
      $region21: #{tpu_custom_call.1} parent=5 // pred_check
        %p152 = pneg %p151
      $region22: #{tpu_custom_call.1} parent=5 // pred_check_branch
        %154 = sbr.rel (%p152) target = $region24
      $region23: #{tpu_custom_call.1} parent=5 // pred_region
        // Predicated region
        $region25: #{tpu_custom_call.1} parent=23 // pred_check
          %p155 = pneg %p36
        $region26: #{tpu_custom_call.1} parent=23 // pred_check_branch
          %157 = sbr.rel (%p155) target = $region28
        $region27: #{tpu_custom_call.1} parent=23 // pred_region
          %s158 = sand.u32 %s26, 1
          %s159 = scalar_lea.sflag [#allocation3], %s158
          %s160 = sand.u32 %s26, 1
          %s161 = smul.addr %s160, 48
          %s162 = scalar_lea.vmem [#allocation2], %s161
          %s164 = ssub.s32 768, 768
          %165 = vsyncadd %s159, %s164
          %s166 = smul.addr %s16, 6
          %s167 = smul.addr %s166, 128
          %s168 = scalar_lea.hbm %s0, %s167
          %s169 = sshll.u32 %s162, 4
          %s170 = int_to_ptr.vmem [resolvable:$true] %s169
          %175 = dma.hbm_to_vmem [thread:$0]  %s168, 768, %s170, %s159, 128, 128, 8
        $region28: #{tpu_custom_call.1} parent=23 // pred_fallthru
          _
      $region24: #{tpu_custom_call.1} parent=5 // pred_fallthru
        _
      %p176 = scmp.le.s32.totalorder 1, %s16
      %p177 = scmp.lt.s32.totalorder %s16, 3
      %p178 = pnand %p176, %p177
      %p179 = pneg %p178
      // Predicated region
      $region29: #{tpu_custom_call.1} parent=5 // pred_check
        _
      $region30: #{tpu_custom_call.1} parent=5 // pred_check_branch
        %181 = sbr.rel (%p178) target = $region32
      $region31: #{tpu_custom_call.1} parent=5 // pred_region
        %s182 = ssub.s32 %s16, 1
        %s183 = sand.u32 %s29, 1
        %s184 = scalar_lea.sflag [#allocation3], %s183
        %s185 = sand.u32 %s29, 1
        %s186 = smul.addr %s185, 48
        %s187 = scalar_lea.vmem [#allocation2], %s186
        // Predicated region
        $region33: #{tpu_custom_call.1} parent=31 // pred_check
          %p188 = pneg %p42
        $region34: #{tpu_custom_call.1} parent=31 // pred_check_branch
          %190 = sbr.rel (%p188) target = $region36
        $region35: #{tpu_custom_call.1} parent=31 // pred_region
          %191 = dma.done %s184, 768
        $region36: #{tpu_custom_call.1} parent=31 // pred_fallthru
          _
        // Predicated region
        $region37: #{tpu_custom_call.1} parent=31 // pred_check
          %p192 = pneg %p63
        $region38: #{tpu_custom_call.1} parent=31 // pred_check_branch
          %194 = sbr.rel (%p192) target = $region40
        $region39: #{tpu_custom_call.1} parent=31 // pred_region
          %195 = dma.done [#allocation6], 128
        $region40: #{tpu_custom_call.1} parent=31 // pred_fallthru
          _
        // Predicated region
        $region41: #{tpu_custom_call.1} parent=31 // pred_check
          %p196 = pneg %p84
        $region42: #{tpu_custom_call.1} parent=31 // pred_check_branch
          %198 = sbr.rel (%p196) target = $region44
        $region43: #{tpu_custom_call.1} parent=31 // pred_region
          %199 = dma.done [#allocation6], 256
        $region44: #{tpu_custom_call.1} parent=31 // pred_fallthru
          _
        %s200 = sand.u32 %s29, 1
        %s201 = scalar_lea.sflag [#allocation3], %s200
        %s202 = sand.u32 %s29, 1
        %s203 = smul.addr %s202, 48
        %s204 = scalar_lea.vmem [#allocation2], %s203
        %p205 = pneg %p42
        %p206 = pneg %p39
        %p207 = pneg %p63
        %p208 = pneg %p60
        %p209 = pneg %p84
        %p210 = pneg %p81
        %p211 = pneg %p110
        %p212 = pneg %p107
        %s213 = sand.u32 %s97, 1
        %s214 = scalar_lea.sflag [#allocation4], %s213
        %s215 = sand.u32 %s97, 1
        %s216 = smul.addr %s215, 16
        %s217 = scalar_lea.vmem [#allocation8], %s216
        %v219 = vld [vmem:[%s187] sm:$0xff]
        %v220 = vld [vmem:[%s187 + $0x8] sm:$0xff]
        %v221 = vmul.f32 %v219, 0.2989
        %v222 = vmul.f32 %v220, 0.2989
        %s223 = scalar_lea.vmem %s187, 16 [#allocation2]
        %v224 = vld [vmem:[%s223] sm:$0xff]
        %v225 = vld [vmem:[%s223 + $0x8] sm:$0xff]
        %v226 = vmul.f32 %v224, 0.587
        %v227 = vmul.f32 %v225, 0.587
        %v228 = vadd.f32 %v221, %v226
        %v229 = vadd.f32 %v222, %v227
        %s230 = scalar_lea.vmem %s187, 32 [#allocation2]
        %v231 = vld [vmem:[%s230] sm:$0xff]
        %v232 = vld [vmem:[%s230 + $0x8] sm:$0xff]
        %v233 = vmul.f32 %v231, 0.114
        %v234 = vmul.f32 %v232, 0.114
        %v235 = vadd.f32 %v228, %v233
        %v236 = vadd.f32 %v229, %v234
        %v237 = vpack.c.bf16 %v236, %v235
        %238 = vxpose.xlu0.c.b16.start [1/8] %v237, 128
        %239 = vxpose.xlu0.c.b16.cont [2/8] 0, 128
        %240 = vxpose.xlu0.c.b16.cont [3/8] 0, 128
        %241 = vxpose.xlu0.c.b16.cont [4/8] 0, 128
        %242 = vxpose.xlu0.c.b16.cont [5/8] 0, 128
        %243 = vxpose.xlu0.c.b16.cont [6/8] 0, 128
        %244 = vxpose.xlu0.c.b16.cont [7/8] 0, 128
        %245 = vxpose.xlu0.c.b16.end [8/8] 0, 128
        %v246 = vpop.trf.xlu0
        %v247 = vpop.trf.xlu0
        %v248 = vpop.trf.xlu0
        %v249 = vpop.trf.xlu0
        %v250 = vpop.trf.xlu0
        %v251 = vpop.trf.xlu0
        %v252 = vpop.trf.xlu0
        %v253 = vpop.trf.xlu0
        %v254 = vld [vmem:[#allocation5] sm:$0xf]
        %v255 = vld [vmem:[#allocation5 + $0x4] sm:$0xf]
        %v258 = vunpack.c.l.b16 %v254
        %v259 = vunpack.c.l.b16 %v255
        %v260 = vpack.c.b16 %v259, %v258
        %vm262 = vcmask 130048
        %v264 = vsel %vm262, %v246, 0
        %266 = vmatprep.subr.bf16.mxu0 0
        %267 = vmatpush1.bf16.msra.mxu0 0
        %268 = vmatprep.subr.bf16.mxu0 0
        %269 = vmatpush1.bf16.msra.mxu0 0
        %270 = vmatprep.subr.bf16.mxu0 0
        %271 = vmatpush1.bf16.msra.mxu0 0
        %272 = vmatprep.subr.bf16.mxu0 0
        %273 = vmatpush1.bf16.msra.mxu0 0
        %274 = vmatprep.subr.bf16.mxu0 0
        %275 = vmatpush1.bf16.msra.mxu0 0
        %276 = vmatprep.subr.bf16.mxu0 0
        %277 = vmatpush1.bf16.msra.mxu0 0
        %278 = vmatprep.subr.bf16.mxu0 0
        %279 = vmatpush1.bf16.msra.mxu0 0
        %280 = vmatprep.subr.bf16.mxu0 0
        %281 = vmatpush1.bf16.msra.mxu0 %v260
        %282 = vmatprep.subr.bf16.mxu0 0
        %283 = vmatpush2.bf16.msra.mxu0 0
        %284 = vmatprep.subr.bf16.mxu0 0
        %285 = vmatpush2.bf16.msra.mxu0 0
        %286 = vmatprep.subr.bf16.mxu0 0
        %287 = vmatpush2.bf16.msra.mxu0 0
        %288 = vmatprep.subr.bf16.mxu0 0
        %289 = vmatpush2.bf16.msra.mxu0 0
        %290 = vmatprep.subr.bf16.mxu0 0
        %291 = vmatpush2.bf16.msra.mxu0 0
        %292 = vmatprep.subr.bf16.mxu0 0
        %293 = vmatpush2.bf16.msra.mxu0 0
        %294 = vmatprep.subr.bf16.mxu0 0
        %295 = vmatpush2.bf16.msra.mxu0 0
        %296 = vmatprep.subr.bf16.mxu0 0
        %297 = vmatpush2.bf16.msra.mxu0 0
        %298 = vmatprep.mubr.bf16.mxu0 0
        %299 = vmatmul.mubr.bf16.gmra.mxu0 %v264
        %v300 = vpop.f32.mrf.mxu0
        %v301 = vadd.f32 0.0, %v300
        %v302 = vpop.f32.mrf.mxu0
        %v303 = vpop.f32.mrf.mxu0
        %v304 = vadd.f32 0.0, %v303
        %v305 = vpop.f32.mrf.mxu0
        %306 = vdwg.mxu0
        %307 = vxpose.xlu0.b32.start [1/16] %v301, 128
        %308 = vxpose.xlu0.b32.cont [2/16] %v304, 128
        %309 = vxpose.xlu0.b32.cont [3/16] 0.0, 128
        %310 = vxpose.xlu0.b32.cont [4/16] 0.0, 128
        %311 = vxpose.xlu0.b32.cont [5/16] 0.0, 128
        %312 = vxpose.xlu0.b32.cont [6/16] 0.0, 128
        %313 = vxpose.xlu0.b32.cont [7/16] 0.0, 128
        %314 = vxpose.xlu0.b32.cont [8/16] 0.0, 128
        %315 = vxpose.xlu0.b32.cont [9/16] 0.0, 128
        %316 = vxpose.xlu0.b32.cont [10/16] 0.0, 128
        %317 = vxpose.xlu0.b32.cont [11/16] 0.0, 128
        %318 = vxpose.xlu0.b32.cont [12/16] 0.0, 128
        %319 = vxpose.xlu0.b32.cont [13/16] 0.0, 128
        %320 = vxpose.xlu0.b32.cont [14/16] 0.0, 128
        %321 = vxpose.xlu0.b32.cont [15/16] 0.0, 128
        %322 = vxpose.xlu0.b32.end [16/16] 0.0, 128
        %v323 = vpop.trf.xlu0
        %v324 = vpop.trf.xlu0
        %v325 = vpop.trf.xlu0
        %v326 = vpop.trf.xlu0
        %v327 = vpop.trf.xlu0
        %v328 = vpop.trf.xlu0
        %v329 = vpop.trf.xlu0
        %v330 = vpop.trf.xlu0
        %v331 = vpop.trf.xlu0
        %v332 = vpop.trf.xlu0
        %v333 = vpop.trf.xlu0
        %v334 = vpop.trf.xlu0
        %v335 = vpop.trf.xlu0
        %v336 = vpop.trf.xlu0
        %v337 = vpop.trf.xlu0
        %v338 = vpop.trf.xlu0
        %341 = vrot.lane.b32.xlu0 %v301, 112
        %v342 = vpop.permute.xlu0 %341
        %343 = vrot.lane.b32.xlu0 %v304, 112
        %v344 = vpop.permute.xlu0 %343
        %347 = vxpose.xlu0.b32.start [1/16] %v342, 128
        %348 = vxpose.xlu0.b32.cont [2/16] %v344, 128
        %349 = vxpose.xlu0.b32.cont [3/16] 0.0, 128
        %350 = vxpose.xlu0.b32.cont [4/16] 0.0, 128
        %351 = vxpose.xlu0.b32.cont [5/16] 0.0, 128
        %352 = vxpose.xlu0.b32.cont [6/16] 0.0, 128
        %353 = vxpose.xlu0.b32.cont [7/16] 0.0, 128
        %354 = vxpose.xlu0.b32.cont [8/16] 0.0, 128
        %355 = vxpose.xlu0.b32.cont [9/16] 0.0, 128
        %356 = vxpose.xlu0.b32.cont [10/16] 0.0, 128
        %357 = vxpose.xlu0.b32.cont [11/16] 0.0, 128
        %358 = vxpose.xlu0.b32.cont [12/16] 0.0, 128
        %359 = vxpose.xlu0.b32.cont [13/16] 0.0, 128
        %360 = vxpose.xlu0.b32.cont [14/16] 0.0, 128
        %361 = vxpose.xlu0.b32.cont [15/16] 0.0, 128
        %362 = vxpose.xlu0.b32.end [16/16] 0.0, 128
        %v363 = vpop.trf.xlu0
        %v364 = vpop.trf.xlu0
        %v365 = vpop.trf.xlu0
        %v366 = vpop.trf.xlu0
        %v367 = vpop.trf.xlu0
        %v368 = vpop.trf.xlu0
        %v369 = vpop.trf.xlu0
        %v370 = vpop.trf.xlu0
        %v371 = vpop.trf.xlu0
        %v372 = vpop.trf.xlu0
        %v373 = vpop.trf.xlu0
        %v374 = vpop.trf.xlu0
        %v375 = vpop.trf.xlu0
        %v376 = vpop.trf.xlu0
        %v377 = vpop.trf.xlu0
        %v378 = vpop.trf.xlu0
        %381 = vrot.lane.b32.xlu0 %v363, 16
        %v382 = vpop.permute.xlu0 %381
        %383 = vrot.lane.b32.xlu0 %v364, 16
        %v384 = vpop.permute.xlu0 %383
        %v387 = vsel %vm262, %v323, %v382
        %v388 = vsel %vm262, %v324, %v384
        %v389 = vpack.c.bf16 %v388, %v387
        %v390 = vld [vmem:[#allocation7] sm:$0xf]
        %v391 = vld [vmem:[#allocation7 + $0x4] sm:$0xf]
        %v392 = vld [vmem:[#allocation7 + $0x8] sm:$0xf]
        %v393 = vld [vmem:[#allocation7 + $0xc] sm:$0xf]
        %v398 = vunpack.c.l.b16 %v390
        %v399 = vunpack.c.l.b16 %v391
        %v400 = vunpack.c.l.b16 %v392
        %v401 = vunpack.c.l.b16 %v393
        %v402 = vpack.c.b16 %v399, %v398
        %v403 = vpack.c.b16 %v401, %v400
        %vm406 = vcmask 261120
        %v408 = vsel %vm406, %v389, 0
        %410 = vmatprep.subr.bf16.mxu0 0
        %411 = vmatpush1.bf16.msra.mxu0 0
        %412 = vmatprep.subr.bf16.mxu0 0
        %413 = vmatpush1.bf16.msra.mxu0 0
        %414 = vmatprep.subr.bf16.mxu0 0
        %415 = vmatpush1.bf16.msra.mxu0 0
        %416 = vmatprep.subr.bf16.mxu0 0
        %417 = vmatpush1.bf16.msra.mxu0 0
        %418 = vmatprep.subr.bf16.mxu0 0
        %419 = vmatpush1.bf16.msra.mxu0 0
        %420 = vmatprep.subr.bf16.mxu0 0
        %421 = vmatpush1.bf16.msra.mxu0 0
        %422 = vmatprep.subr.bf16.mxu0 0
        %423 = vmatpush1.bf16.msra.mxu0 %v403
        %424 = vmatprep.subr.bf16.mxu0 0
        %425 = vmatpush1.bf16.msra.mxu0 %v402
        %426 = vmatprep.subr.bf16.mxu0 0
        %427 = vmatpush2.bf16.msra.mxu0 0
        %428 = vmatprep.subr.bf16.mxu0 0
        %429 = vmatpush2.bf16.msra.mxu0 0
        %430 = vmatprep.subr.bf16.mxu0 0
        %431 = vmatpush2.bf16.msra.mxu0 0
        %432 = vmatprep.subr.bf16.mxu0 0
        %433 = vmatpush2.bf16.msra.mxu0 0
        %434 = vmatprep.subr.bf16.mxu0 0
        %435 = vmatpush2.bf16.msra.mxu0 0
        %436 = vmatprep.subr.bf16.mxu0 0
        %437 = vmatpush2.bf16.msra.mxu0 0
        %438 = vmatprep.subr.bf16.mxu0 0
        %439 = vmatpush2.bf16.msra.mxu0 0
        %440 = vmatprep.subr.bf16.mxu0 0
        %441 = vmatpush2.bf16.msra.mxu0 0
        %442 = vmatprep.mubr.bf16.mxu0 0
        %443 = vmatmul.mubr.bf16.gmra.mxu0 %v408
        %v444 = vpop.f32.mrf.mxu0
        %v445 = vadd.f32 0.0, %v444
        %v446 = vpop.f32.mrf.mxu0
        %v447 = vpop.f32.mrf.mxu0
        %v448 = vadd.f32 0.0, %v447
        %v449 = vpop.f32.mrf.mxu0
        %450 = vdwg.mxu0
        %v451 = vand.u32 2147483647, %v445
        %v452 = vand.u32 2147483647, %v448
        %v453 = vlog2.pop %v451
        %v454 = vmul.f32 %v453, 0.6931472
        %v455 = vlog2.pop %v452
        %v456 = vmul.f32 %v455, 0.6931472
        %v457 = vmul.f32 %v454, 20.0
        %v458 = vmul.f32 %v456, 20.0
        %459 = vst.msk [vmem:[%s217] sm:$0xff] %vm406, %v457
        %460 = vst.msk [vmem:[%s217 + $0x8] sm:$0xff] %vm406, %v458
        %s461 = sand.u32 %s97, 1
        %s462 = scalar_lea.sflag [#allocation4], %s461
        %s463 = sand.u32 %s97, 1
        %s464 = smul.addr %s463, 16
        %s465 = scalar_lea.vmem [#allocation8], %s464
        // Predicated region
        $region45: #{tpu_custom_call.1} parent=31 // pred_check
          %p466 = pneg %p107
        $region46: #{tpu_custom_call.1} parent=31 // pred_check_branch
          %468 = sbr.rel (%p466) target = $region48
        $region47: #{tpu_custom_call.1} parent=31 // pred_region
          %s470 = ssub.s32 256, 256
          %471 = vsyncadd %s462, %s470
          %s472 = smul.addr %s21, 2
          %s473 = smul.addr %s472, 128
          %s474 = scalar_lea.hbm %s3, %s473
          %s475 = sshll.u32 %s465, 4
          %s476 = int_to_ptr.vmem [resolvable:$true] %s475
          %481 = dma.vmem_to_hbm [thread:$0]  %s476, 256, %s474, %s462, 128, 128, 8
        $region48: #{tpu_custom_call.1} parent=31 // pred_fallthru
          _
      $region32: #{tpu_custom_call.1} parent=5 // pred_fallthru
        _
      %p482 = scmp.le.s32.totalorder 2, %s16
      // Predicated region
      $region49: #{tpu_custom_call.1} parent=5 // pred_check
        %p483 = pneg %p482
      $region50: #{tpu_custom_call.1} parent=5 // pred_check_branch
        %485 = sbr.rel (%p483) target = $region52
      $region51: #{tpu_custom_call.1} parent=5 // pred_region
        %s486 = ssub.s32 %s16, 2
        // Predicated region
        $region53: #{tpu_custom_call.1} parent=51 // pred_check
          %p487 = pneg %p113
        $region54: #{tpu_custom_call.1} parent=51 // pred_check_branch
          %489 = sbr.rel (%p487) target = $region56
        $region55: #{tpu_custom_call.1} parent=51 // pred_region
          %s490 = sand.u32 %s98, 1
          %s491 = scalar_lea.sflag [#allocation4], %s490
          %s492 = sand.u32 %s98, 1
          %s493 = smul.addr %s492, 16
          %s494 = scalar_lea.vmem [#allocation8], %s493
          %495 = dma.done %s491, 256
        $region56: #{tpu_custom_call.1} parent=51 // pred_fallthru
          _
      $region52: #{tpu_custom_call.1} parent=5 // pred_fallthru
        _
    $region6: #{tpu_custom_call.1} parent=1 // loop_footer
      %s20 = sadd.s32 1, %s16
    $region7: #{tpu_custom_call.1} parent=1 // loop_footer_branch
      %15 = sbr.rel target = $region3
    $region8: #{tpu_custom_call.1} parent=1 // loop_exit
      _
    %496 = vsyncpa [#allocation3], 1
    %s497 = scalar_lea.sflag [#allocation3], 1
    %498 = vsyncpa %s497, 1
    %499 = vsyncpa [#allocation6], 1
    %500 = vsyncpa [#allocation4], 1
    %s501 = scalar_lea.sflag [#allocation4], 1
    %502 = vsyncpa %s501, 1

</llo_original>
